<compile_context>
chip_gen: v7x
topology: tpu7x:2x2x1
jax: 0.10.0
libtpu: 0.0.40
codegen_flags: <defaults>
</compile_context>

<pallas_src>
import functools

import jax
import jax.numpy as jnp
from jax.experimental import pallas as pl
from jax.experimental.pallas import tpu as pltpu


_LANE = 128


def _round_up(x, m):
    return ((x + m - 1) // m) * m


def _sublane(dtype):
    """Native second-minor tile size: 8 (4-byte), 16 (2-byte), 32 (1-byte)."""
    return max(8, 32 // jnp.dtype(dtype).itemsize)


def _downsample_kernel_concat(x_ref, o_ref, *, nfold):
    # x_ref: (tt, nfold, bb, nf)    o_ref: (tt, bb, nfold * nf)
    # Assemble the full output tile in vregs and issue a single full-width
    # store stream instead of nfold masked partial stores of width nf.
    parts = [x_ref[:, j, :, :] for j in range(nfold)]
    o_ref[...] = jnp.concatenate(parts, axis=-1)


def _downsample_kernel_slices(x_ref, o_ref, *, nfold, nf):
    # Fallback body using only static lane-slice stores (always lowers, but
    # issues nfold masked stores per row when nf < 128).
    for j in range(nfold):
        o_ref[:, :, j * nf:(j + 1) * nf] = x_ref[:, j, :, :]


def _padded_tile_bytes(tt, nfold, bb, nf, dtype):
    """VMEM bytes of one (input + output) tile pair, with (sublane, lane) padding."""
    sub = _sublane(dtype)
    itemsize = jnp.dtype(dtype).itemsize
    in_bytes = tt * nfold * _round_up(bb, sub) * _round_up(nf, _LANE) * itemsize
    out_bytes = tt * _round_up(bb, sub) * _round_up(nfold * nf, _LANE) * itemsize
    return in_bytes + out_bytes


def _vmem_budget_bytes():
    """Generation-aware budget for the double-buffered pipelined working set."""
    try:
        cap = pltpu.get_tpu_info().vmem_capacity_bytes
    except Exception:
        cap = 64 * 1024 * 1024          # v7x worst case (64 MiB / TensorCore)
    return int(min(24 * 1024 * 1024, cap // 4))


def _pick_batch_tile(nb, sub, max_bb=256):
    """Sublane-aligned batch tile; full batch when nb is below one sublane group."""
    if nb <= sub:
        return nb                        # "full dim" keeps the block legal
    bb = sub
    while bb * 2 <= min(nb, max_bb) and nb % (bb * 2) == 0:
        bb *= 2
    return bb


def _pick_time_tile(nt_out, nfold, bb, nf, dtype, budget_bytes):
    """Largest time tile whose double-buffered padded footprint fits the budget."""
    per_tt = _padded_tile_bytes(1, nfold, bb, nf, dtype)
    tt = max(1, budget_bytes // (2 * per_tt))    # x2: double-buffered pipeline
    tt = min(tt, nt_out)
    if tt < nt_out:
        tt = max(8, (tt // 8) * 8)
    elif nt_out > 8:
        # Keep at least 2 time steps so megacore (v7x) has work to split even
        # when the batch axis only has a single block.
        tt = min(nt_out, _round_up((nt_out + 1) // 2, 8))
    return int(max(1, tt))


def downsample(x, nfold, *, time_tile=None, batch_tile=None, assemble="concat"):
    """Pallas DownSample: (nt, nb, nf) -> (nt // nfold, nb, nf * nfold)."""
    nt, nb, nf = x.shape
    assert nt % nfold == 0, "Number of time points must be divisible by nfold"
    if nfold == 1:
        return x
    nt_out = nt // nfold
    nf_out = nf * nfold
    dtype = x.dtype
    itemsize = jnp.dtype(dtype).itemsize
    sub = _sublane(dtype)

    # Free, contiguous view: x4[t, j, b, f] == x[t*nfold + j, b, f].
    x4 = x.reshape(nt_out, nfold, nb, nf)

    bb = batch_tile if batch_tile is not None else _pick_batch_tile(nb, sub)
    bb = max(1, min(int(bb), nb))
    budget = _vmem_budget_bytes()
    tt = (time_tile if time_tile is not None
          else _pick_time_tile(nt_out, nfold, bb, nf, dtype, budget))
    tt = max(1, min(int(tt), nt_out))

    # Ragged tails are handled by Pallas; no decrement-until-divisor fallback.
    grid = (pl.cdiv(nt_out, tt), pl.cdiv(nb, bb))

    pipelined_bytes = 2 * _padded_tile_bytes(tt, nfold, bb, nf, dtype)
    vmem_limit = int(min(48 * 1024 * 1024,
                         max(32 * 1024 * 1024, pipelined_bytes + (8 << 20))))

    if assemble == "concat":
        kernel = functools.partial(_downsample_kernel_concat, nfold=nfold)
    else:
        kernel = functools.partial(_downsample_kernel_slices, nfold=nfold, nf=nf)

    return pl.pallas_call(
        kernel,
        out_shape=jax.ShapeDtypeStruct((nt_out, nb, nf_out), dtype),
        grid_spec=pltpu.PrefetchScalarGridSpec(
            num_scalar_prefetch=0,
            grid=grid,
            in_specs=[
                pl.BlockSpec((tt, nfold, bb, nf), lambda i, b: (i, 0, b, 0)),
            ],
            out_specs=pl.BlockSpec((tt, bb, nf_out), lambda i, b: (i, b, 0)),
        ),
        compiler_params=pltpu.CompilerParams(
            dimension_semantics=("parallel", "parallel"),
            vmem_limit_bytes=vmem_limit,
        ),
        cost_estimate=pl.CostEstimate(
            flops=0,
            transcendentals=0,
            bytes_accessed=2 * nt * nb * nf * itemsize),
    )(x4)


def _reference(x, nfold):
    nt, nb, nf = x.shape
    y = jnp.swapaxes(x, 0, 1)                        # (nb, nt, nf)
    z = y.reshape(nb, nt // nfold, nf * nfold)
    return jnp.swapaxes(z, 0, 1)                     # (nt//nfold, nb, nf*nfold)


if __name__ == "__main__":
    key = jax.random.PRNGKey(0)
    k1, k2 = jax.random.split(key)

    # Small case (seq, batch, feat) with nb below one sublane group.
    nt, nb, nf, nfold = 8, 2, 32, 2
    x = jax.random.normal(k1, (nt, nb, nf), dtype=jnp.float32)
    out = jax.block_until_ready(downsample(x, nfold))
    assert out.shape == (nt // nfold, nb, nf * nfold)
    assert jnp.array_equal(out, _reference(x, nfold)), "mismatch vs reference"

    # Larger batch: exercises sublane-aligned batch tiling + multi-step grid
    # on both axes (time grid 2, batch grid 3), nf*nfold = 128 lane-dense store.
    nt2, nb2, nf2, nfold2 = 64, 24, 32, 4
    x2 = jax.random.normal(k2, (nt2, nb2, nf2), dtype=jnp.float32)
    out2 = jax.block_until_ready(downsample(x2, nfold2))
    assert out2.shape == (nt2 // nfold2, nb2, nf2 * nfold2)
    assert jnp.array_equal(out2, _reference(x2, nfold2)), "mismatch vs reference (tiled)"

    print("KERNEL_OK")
</pallas_src>

<mosaic_0001>
module attributes {stable_mosaic.version = 11 : i64} {
  func.func @_downsample_kernel_concat(%arg0: i32, %arg1: i32, %arg2: memref<4x2x2x32xf32, #tpu.memory_space<vmem>>, %arg3: memref<4x2x64xf32, #tpu.memory_space<vmem>>) attributes {dimension_semantics = [#tpu.dimension_semantics<parallel>, #tpu.dimension_semantics<parallel>], iteration_bounds = array<i64: 1, 1>, scalar_prefetch = 0 : i64, scratch_operands = 0 : i64, tpu.core_type = #tpu.core_type<tc>, window_params = [{transform_indices = @transform_0, window_bounds = array<i64: 4, 2, 2, 32>}, {transform_indices = @transform_1, window_bounds = array<i64: 4, 2, 64>}]} {
    %c0 = arith.constant 0 : index
    %c0_0 = arith.constant 0 : index
    %c0_1 = arith.constant 0 : index
    %c0_2 = arith.constant 0 : index
    %0 = vector.load %arg2[%c0, %c0_0, %c0_1, %c0_2] : memref<4x2x2x32xf32, #tpu.memory_space<vmem>>, vector<4x1x2x32xf32>
    %1 = vector.shape_cast %0 : vector<4x1x2x32xf32> to vector<4x2x32xf32>
    %c0_3 = arith.constant 0 : index
    %c1 = arith.constant 1 : index
    %c0_4 = arith.constant 0 : index
    %c0_5 = arith.constant 0 : index
    %2 = vector.load %arg2[%c0_3, %c1, %c0_4, %c0_5] : memref<4x2x2x32xf32, #tpu.memory_space<vmem>>, vector<4x1x2x32xf32>
    %3 = vector.shape_cast %2 : vector<4x1x2x32xf32> to vector<4x2x32xf32>
    %4 = tpu.concatenate %1, %3 in 2 : vector<4x2x32xf32>, vector<4x2x32xf32> -> vector<4x2x64xf32>
    %c0_6 = arith.constant 0 : index
    %c0_7 = arith.constant 0 : index
    %c0_8 = arith.constant 0 : index
    %5 = vector.load %arg3[%c0_6, %c0_7, %c0_8] : memref<4x2x64xf32, #tpu.memory_space<vmem>>, vector<4x2x64xf32>
    tpu.vector_store %arg3[%c0_6, %c0_7, %c0_8], %4 {strides = array<i32>} : memref<4x2x64xf32, #tpu.memory_space<vmem>>, vector<4x2x64xf32>,
    return
  }
  func.func @transform_0(%arg0: i32, %arg1: i32) -> (i32, i32, i32, i32) {
    %c0_i32 = arith.constant 0 : i32
    %c0_i32_0 = arith.constant 0 : i32
    %c0_i32_1 = arith.constant 0 : i32
    return %arg0, %c0_i32, %arg1, %c0_i32_0 : i32, i32, i32, i32
  }
  func.func @transform_1(%arg0: i32, %arg1: i32) -> (i32, i32, i32) {
    %c0_i32 = arith.constant 0 : i32
    %c0_i32_0 = arith.constant 0 : i32
    return %arg0, %arg1, %c0_i32 : i32, i32, i32
  }
}

</mosaic_0001>

<llo_original>
// kernel: tpu_custom_call.1
$region0: #{tpu_custom_call.1}
  #allocation0 [shape = 'u32[]', space=smem, size = 0x4, offset = 0x4, fixed_abs, tag = 'smem constant byte address 0x4 - core index']
  #allocation1 [shape = 'u32[144,128]{1,0:T(1,128)}', space=vmem, size = 0x12000, scoped, tag = 'internal scratch']
  %s0 = inlined_call_operand.hbm [shape: f32[4,2,2,32], index: 0, kind: input, shape index: {}]
  %s1 = inlined_call_operand.hbm [shape: f32[4,2,64], index: 1, kind: output, shape index: {}]
  %s2 = sld [smem:[#allocation0]]
  $region18: #{tpu_custom_call.1} parent=0
    _
  %s4 = ssub.s32 1, %s2
  %s5 = scalar_select 0, %s4, %s2
  $region1: #{tpu_custom_call.1} parent=0
    #allocation2 [shape = 'u8[8192]{0}', space=vmem, size = 0x2000, scoped, tag = 'input window, operand 0, single buffered']
    #allocation3 [shape = 's32[1]{0}', space=sflag, size = 0x4, scoped, tag = 'scoped memory for tpu_custom_call.1']
    #allocation4 [shape = 's32[1]{0}', space=sflag, size = 0x4, scoped, tag = 'scoped memory for tpu_custom_call.1']
    #allocation5 [shape = 'u8[4096]{0}', space=vmem, size = 0x1000, scoped, tag = 'output window, operand 0, single buffered']
    %6 = vsyncpa [#allocation3], 0
    %7 = vsyncpa [#allocation4], 0
    // Predicated region
    $region2: #{tpu_custom_call.1} parent=1 // pred_check
      _
    $region3: #{tpu_custom_call.1} parent=1 // pred_check_branch
      %9 = sbr.rel (0) target = $region5
    $region4: #{tpu_custom_call.1} parent=1 // pred_region
      %s11 = ssub.s32 256, 256
      %12 = vsyncadd [#allocation3], %s11
      %s13 = sshll.u32 [#allocation2], 4
      %s14 = int_to_ptr.vmem [resolvable:$true] %s13
      %19 = dma.hbm_to_vmem [thread:$0]  %s0, 256, %s14, [#allocation3], 32, 32, 2
    $region5: #{tpu_custom_call.1} parent=1 // pred_fallthru
      _
    // Predicated region
    $region6: #{tpu_custom_call.1} parent=1 // pred_check
      _
    $region7: #{tpu_custom_call.1} parent=1 // pred_check_branch
      %21 = sbr.rel (0) target = $region9
    $region8: #{tpu_custom_call.1} parent=1 // pred_region
      %22 = dma.done [#allocation3], 256
    $region9: #{tpu_custom_call.1} parent=1 // pred_fallthru
      _
    %v23 = vld [vmem:[#allocation2] sm:$0x3]
    %v24 = vld [vmem:[#allocation2 + $0x4] sm:$0x3]
    %v25 = vld [vmem:[#allocation2 + $0x8] sm:$0x3]
    %v26 = vld [vmem:[#allocation2 + $0xc] sm:$0x3]
    %s27 = scalar_lea.vmem [#allocation2], 2
    %v28 = vld [vmem:[%s27] sm:$0x3]
    %v29 = vld [vmem:[%s27 + $0x4] sm:$0x3]
    %v30 = vld [vmem:[%s27 + $0x8] sm:$0x3]
    %v31 = vld [vmem:[%s27 + $0xc] sm:$0x3]
    %36 = vrot.lane.b32.xlu0 %v28, 32
    %v37 = vpop.permute.xlu0 %36
    %38 = vrot.lane.b32.xlu0 %v29, 32
    %v39 = vpop.permute.xlu0 %38
    %40 = vrot.lane.b32.xlu0 %v30, 32
    %v41 = vpop.permute.xlu0 %40
    %42 = vrot.lane.b32.xlu0 %v31, 32
    %v43 = vpop.permute.xlu0 %42
    %vm48 = vcmask 261120
    %v49 = vsel %vm48, %v23, %v37
    %v50 = vsel %vm48, %v24, %v39
    %v51 = vsel %vm48, %v25, %v41
    %v52 = vsel %vm48, %v26, %v43
    %vm53 = vcmask 517120
    %54 = vst.msk [vmem:[#allocation5] sm:$0x3] %vm53, %v49
    %55 = vst.msk [vmem:[#allocation5 + $0x2] sm:$0x3] %vm53, %v50
    %56 = vst.msk [vmem:[#allocation5 + $0x4] sm:$0x3] %vm53, %v51
    %57 = vst.msk [vmem:[#allocation5 + $0x6] sm:$0x3] %vm53, %v52
    // Predicated region
    $region10: #{tpu_custom_call.1} parent=1 // pred_check
      _
    $region11: #{tpu_custom_call.1} parent=1 // pred_check_branch
      %59 = sbr.rel (0) target = $region13
    $region12: #{tpu_custom_call.1} parent=1 // pred_region
      %s61 = ssub.s32 128, 128
      %62 = vsyncadd [#allocation4], %s61
      %s63 = sshll.u32 [#allocation5], 4
      %s64 = int_to_ptr.vmem [resolvable:$true] %s63
      %69 = dma.vmem_to_hbm [thread:$0]  %s64, 128, %s1, [#allocation4], 32, 32, 2
    $region13: #{tpu_custom_call.1} parent=1 // pred_fallthru
      _
    // Predicated region
    $region14: #{tpu_custom_call.1} parent=1 // pred_check
      _
    $region15: #{tpu_custom_call.1} parent=1 // pred_check_branch
      %71 = sbr.rel (0) target = $region17
    $region16: #{tpu_custom_call.1} parent=1 // pred_region
      %72 = dma.done [#allocation4], 128
    $region17: #{tpu_custom_call.1} parent=1 // pred_fallthru
      _
    %73 = vsyncpa [#allocation3], 1
    %74 = vsyncpa [#allocation4], 1

</llo_original>
